<compile_context>
chip_gen: v7x
topology: tpu7x:2x2x1
jax: 0.10.0
libtpu: 0.0.40
codegen_flags: <defaults>
</compile_context>

<pallas_src>
import jax
import jax.numpy as jnp
from jax.experimental import pallas as pl
from jax.experimental.pallas import tpu as pltpu


def _orthogonal_fusion_kernel(fg_col_ref, fg_hat_ref, fl_ref, out_ref):
    # fg_col_ref : (1, c, 1)   raw fg, channels on the sublane axis
    # fg_hat_ref : (1, 1, c)   fg / ||fg||, channels on the lane axis
    # fl_ref     : (1, c, TS)  spatial tile of local features
    # out_ref    : (1, 2c, TS)
    c = fl_ref.shape[1]
    ts = fl_ref.shape[2]

    fl = fl_ref[0]           # (c, TS), native dtype (no blanket upcast)
    fg_col = fg_col_ref[0]   # (c, 1)
    fg_hat = fg_hat_ref[0]   # (1, c)

    # per-spatial dot product with the *normalized* fg: (1,c)@(c,TS) on the MXU,
    # f32 accumulation, full-precision passes for f32 inputs.
    dot = jnp.dot(fg_hat, fl,
                  preferred_element_type=jnp.float32,
                  precision=jax.lax.Precision.HIGHEST)            # (1, TS) f32

    # proj[c, s] = (fg . fl[:, s]) / ||fg|| * fg[c]   (outer-product broadcast)
    proj = (dot * fg_col.astype(jnp.float32)).astype(fl.dtype)    # (c, TS)

    out_ref[0, :c, :] = (fl - proj).astype(out_ref.dtype)
    out_ref[0, c:, :] = jnp.broadcast_to(fg_col, (c, ts)).astype(out_ref.dtype)


def _vmem_budget_bytes():
    """Per-generation byte budget for the double-buffered fl+out blocks."""
    try:
        cap = pltpu.get_tpu_info().vmem_capacity_bytes
    except Exception:
        cap = 64 << 20  # conservative (v7x-sized)
    # ~3/8 of physical VMEM for this kernel's pipelined blocks:
    # -> ~24 MiB on v7x (64 MiB VMEM), capped at 48 MiB on v5e/v6e (128 MiB VMEM).
    return int(min(48 << 20, max(16 << 20, (cap * 3) // 8)))


def _pick_spatial_tile(c, s_pad128, itemsize, budget_bytes):
    # per lane column, double-buffered: fl block (c rows) + out block (2c rows)
    per_lane = 2 * 3 * c * itemsize
    ts = (budget_bytes // per_lane) // 128 * 128
    ts = max(128, int(ts))
    return int(min(ts, s_pad128))


def orthogonal_fusion(fl, fg, *, spatial_tile=None):
    """fl: (bs, c, w, h), fg: (bs, c)  ->  (bs, 2c, w, h)"""
    bs, c, w, h = fl.shape
    S = w * h
    itemsize = jnp.dtype(fl.dtype).itemsize

    s_pad128 = pl.cdiv(S, 128) * 128
    ts = spatial_tile if spatial_tile is not None else _pick_spatial_tile(
        c, s_pad128, itemsize, _vmem_budget_bytes())
    s_pad = pl.cdiv(S, ts) * ts
    n_s = s_pad // ts

    fl2 = fl.reshape(bs, c, S)
    if s_pad != S:
        # lane-dense padding so output stores are unmasked 128-wide vst
        fl2 = jnp.pad(fl2, ((0, 0), (0, 0), (0, s_pad - S)))

    # Precompute fg / ||fg|| once per batch row (PyTorch divides by the norm,
    # not the squared norm; zero rows give inf/nan exactly like the reference).
    fg_f32 = fg.astype(jnp.float32)
    fg_hat = (fg_f32 / jnp.sqrt(jnp.sum(fg_f32 * fg_f32, axis=1, keepdims=True))
              ).astype(fg.dtype)

    fg_col = fg.reshape(bs, c, 1)           # channels on sublanes
    fg_hat_row = fg_hat.reshape(bs, 1, c)   # channels on lanes

    # Explicit scoped-VMEM limit: double-buffered blocks + slack.
    needed = 2 * (ts * c + ts * 2 * c + 2 * c) * itemsize + (4 << 20)
    vmem_limit = int(min(110 << 20, max(needed, 32 << 20)))

    out = pl.pallas_call(
        _orthogonal_fusion_kernel,
        out_shape=jax.ShapeDtypeStruct((bs, 2 * c, s_pad), fl.dtype),
        grid_spec=pltpu.PrefetchScalarGridSpec(
            num_scalar_prefetch=0,
            grid=(bs, n_s),
            in_specs=[
                pl.BlockSpec((1, c, 1), lambda b, s: (b, 0, 0)),    # fg (raw)
                pl.BlockSpec((1, 1, c), lambda b, s: (b, 0, 0)),    # fg / ||fg||
                pl.BlockSpec((1, c, ts), lambda b, s: (b, 0, s)),   # fl tile
            ],
            out_specs=pl.BlockSpec((1, 2 * c, ts), lambda b, s: (b, 0, s)),
        ),
        compiler_params=pltpu.CompilerParams(
            dimension_semantics=("parallel", "parallel"),
            vmem_limit_bytes=vmem_limit,
        ),
    )(fg_col, fg_hat_row, fl2)

    if s_pad != S:
        out = out[:, :, :S]
    return out.reshape(bs, 2 * c, w, h)


def _reference(fl, fg):
    bs, c, w, h = fl.shape
    fl_flat = fl.reshape(bs, c, -1)
    dot = jnp.sum(fg[:, :, None] * fl_flat, axis=1).reshape(bs, 1, w, h)
    fg_norm = jnp.sqrt(jnp.sum(fg * fg, axis=1))
    fl_proj = dot / fg_norm[:, None, None, None] * fg[:, :, None, None]
    fl_orth = fl - fl_proj
    fg_b = jnp.broadcast_to(fg[:, :, None, None], (bs, c, w, h))
    return jnp.concatenate([fl_orth, fg_b], axis=1)


if __name__ == "__main__":
    key = jax.random.PRNGKey(0)
    k1, k2 = jax.random.split(key)
    bs, c, w, h = 2, 8, 16, 16
    fl = jax.random.normal(k1, (bs, c, w, h), dtype=jnp.float32)
    fg = jax.random.normal(k2, (bs, c), dtype=jnp.float32)

    out = orthogonal_fusion(fl, fg)
    jax.block_until_ready(out)

    ref = _reference(fl, fg)
    assert out.shape == (bs, 2 * c, w, h), out.shape
    assert jnp.allclose(out, ref, atol=1e-5, rtol=1e-5), "mismatch vs reference"

    print("KERNEL_OK")
</pallas_src>

<mosaic_0001>
module attributes {stable_mosaic.version = 11 : i64} {
  func.func @_orthogonal_fusion_kernel(%arg0: i32, %arg1: i32, %arg2: memref<1x8x1xf32, #tpu.memory_space<vmem>>, %arg3: memref<1x1x8xf32, #tpu.memory_space<vmem>>, %arg4: memref<1x8x256xf32, #tpu.memory_space<vmem>>, %arg5: memref<1x16x256xf32, #tpu.memory_space<vmem>>) attributes {dimension_semantics = [#tpu.dimension_semantics<parallel>, #tpu.dimension_semantics<parallel>], iteration_bounds = array<i64: 2, 1>, scalar_prefetch = 0 : i64, scratch_operands = 0 : i64, tpu.core_type = #tpu.core_type<tc>, window_params = [{transform_indices = @transform_0, window_bounds = array<i64: 1, 8, 1>}, {transform_indices = @transform_1, window_bounds = array<i64: 1, 1, 8>}, {transform_indices = @transform_2, window_bounds = array<i64: 1, 8, 256>}, {transform_indices = @transform_3, window_bounds = array<i64: 1, 16, 256>}]} {
    %c0 = arith.constant 0 : index
    %c0_0 = arith.constant 0 : index
    %c0_1 = arith.constant 0 : index
    %0 = vector.load %arg4[%c0, %c0_0, %c0_1] : memref<1x8x256xf32, #tpu.memory_space<vmem>>, vector<1x8x256xf32>
    %1 = vector.shape_cast %0 : vector<1x8x256xf32> to vector<8x256xf32>
    %c0_2 = arith.constant 0 : index
    %c0_3 = arith.constant 0 : index
    %c0_4 = arith.constant 0 : index
    %2 = vector.load %arg2[%c0_2, %c0_3, %c0_4] : memref<1x8x1xf32, #tpu.memory_space<vmem>>, vector<1x8x1xf32>
    %3 = vector.shape_cast %2 : vector<1x8x1xf32> to vector<8x1xf32>
    %c0_5 = arith.constant 0 : index
    %c0_6 = arith.constant 0 : index
    %c0_7 = arith.constant 0 : index
    %4 = vector.load %arg3[%c0_5, %c0_6, %c0_7] : memref<1x1x8xf32, #tpu.memory_space<vmem>>, vector<1x1x8xf32>
    %5 = vector.shape_cast %4 : vector<1x1x8xf32> to vector<1x8xf32>
    %cst = arith.constant dense<0.000000e+00> : vector<1x256xf32>
    %6 = tpu.matmul %5, %1, %cst {dimension_numbers = #tpu.dot_dimension_numbers<[1], [0], [0], [1], [0, 0, 1, 1], [], []>, precision = #tpu.contract_precision<fp32>} : vector<1x8xf32>, vector<8x256xf32>, vector<1x256xf32> -> vector<1x256xf32>
    %7 = vector.broadcast %6 : vector<1x256xf32> to vector<8x256xf32>
    %8 = vector.broadcast %3 : vector<8x1xf32> to vector<8x256xf32>
    %9 = arith.mulf %7, %8 : vector<8x256xf32>
    %10 = arith.subf %1, %9 : vector<8x256xf32>
    %c0_8 = arith.constant 0 : index
    %c0_9 = arith.constant 0 : index
    %c0_10 = arith.constant 0 : index
    %11 = vector.load %arg5[%c0_8, %c0_9, %c0_10] : memref<1x16x256xf32, #tpu.memory_space<vmem>>, vector<1x8x256xf32>
    %12 = vector.shape_cast %11 : vector<1x8x256xf32> to vector<8x256xf32>
    %13 = vector.shape_cast %10 : vector<8x256xf32> to vector<1x8x256xf32>
    tpu.vector_store %arg5[%c0_8, %c0_9, %c0_10], %13 {strides = array<i32>} : memref<1x16x256xf32, #tpu.memory_space<vmem>>, vector<1x8x256xf32>,
    %14 = vector.shape_cast %3 : vector<8x1xf32> to vector<8x1xf32>
    %15 = vector.broadcast %14 : vector<8x1xf32> to vector<8x256xf32>
    %c0_11 = arith.constant 0 : index
    %c8 = arith.constant 8 : index
    %c0_12 = arith.constant 0 : index
    %16 = vector.load %arg5[%c0_11, %c8, %c0_12] : memref<1x16x256xf32, #tpu.memory_space<vmem>>, vector<1x8x256xf32>
    %17 = vector.shape_cast %16 : vector<1x8x256xf32> to vector<8x256xf32>
    %18 = vector.shape_cast %15 : vector<8x256xf32> to vector<1x8x256xf32>
    tpu.vector_store %arg5[%c0_11, %c8, %c0_12], %18 {strides = array<i32>} : memref<1x16x256xf32, #tpu.memory_space<vmem>>, vector<1x8x256xf32>,
    return
  }
  func.func @transform_0(%arg0: i32, %arg1: i32) -> (i32, i32, i32) {
    %c0_i32 = arith.constant 0 : i32
    %c0_i32_0 = arith.constant 0 : i32
    %c0_i32_1 = arith.constant 0 : i32
    return %arg0, %c0_i32, %c0_i32_0 : i32, i32, i32
  }
  func.func @transform_1(%arg0: i32, %arg1: i32) -> (i32, i32, i32) {
    %c0_i32 = arith.constant 0 : i32
    %c0_i32_0 = arith.constant 0 : i32
    %c0_i32_1 = arith.constant 0 : i32
    return %arg0, %c0_i32, %c0_i32_0 : i32, i32, i32
  }
  func.func @transform_2(%arg0: i32, %arg1: i32) -> (i32, i32, i32) {
    %c0_i32 = arith.constant 0 : i32
    %c0_i32_0 = arith.constant 0 : i32
    return %arg0, %c0_i32, %arg1 : i32, i32, i32
  }
  func.func @transform_3(%arg0: i32, %arg1: i32) -> (i32, i32, i32) {
    %c0_i32 = arith.constant 0 : i32
    %c0_i32_0 = arith.constant 0 : i32
    return %arg0, %c0_i32, %arg1 : i32, i32, i32
  }
}

</mosaic_0001>

<llo_original>
// kernel: tpu_custom_call.1
$region0: #{tpu_custom_call.1}
  #allocation0 [shape = 'u32[]', space=smem, size = 0x4, offset = 0x4, fixed_abs, tag = 'smem constant byte address 0x4 - core index']
  #allocation1 [shape = 'u32[144,128]{1,0:T(1,128)}', space=vmem, size = 0x12000, scoped, tag = 'internal scratch']
  %s0 = inlined_call_operand.vmem [shape: f32[2,8,1], index: 0, kind: input, shape index: {}]
  %s1 = inlined_call_operand.vmem [shape: f32[2,1,8], index: 1, kind: input, shape index: {}]
  %s2 = inlined_call_operand.hbm [shape: f32[2,8,256], index: 2, kind: input, shape index: {}]
  %s3 = inlined_call_operand.hbm [shape: f32[2,16,256], index: 3, kind: output, shape index: {}]
  %s4 = sld [smem:[#allocation0]]
  $region49: #{tpu_custom_call.1} parent=0
    _
  %s6 = ssub.s32 1, %s4
  %s7 = scalar_select 0, %s6, %s4
  $region1: #{tpu_custom_call.1} parent=0
    #allocation2 [shape = 'u8[16384]{0}', space=vmem, size = 0x4000, scoped, tag = 'input window, operand 2']
    #allocation3 [shape = 's32[2]{0}', space=sflag, size = 0x8, scoped, tag = 'scoped memory for tpu_custom_call.1']
    #allocation4 [shape = 's32[2]{0}', space=sflag, size = 0x8, scoped, tag = 'scoped memory for tpu_custom_call.1']
    #allocation5 [shape = 'u8[32768]{0}', space=vmem, size = 0x8000, scoped, tag = 'output window, operand 0']
    %8 = vsyncpa [#allocation3], 0
    %s9 = scalar_lea.sflag [#allocation3], 1
    %10 = vsyncpa %s9, 0
    %11 = vsyncpa [#allocation4], 0
    %s12 = scalar_lea.sflag [#allocation4], 1
    %13 = vsyncpa %s12, 0
    loop: start=0, step=1, limit=4
    $region2: #{tpu_custom_call.1} parent=1 // loop_pre_header
      _
    $region3: #{tpu_custom_call.1} parent=1 // loop_header
      %s15 = sphi 0, %s19
      %p16 = scmp.ge.s32.totalorder %s15, 4
      %s22 = sphi 0, %s34
      %s23 = sphi 0, %s30
      %s24 = sphi 0, %s22
      %s25 = sphi 0, %s23
      %s26 = sphi 0, %s24
      %s27 = sphi 0, %s25
      %s37 = sphi 0, %s39
      %s40 = sphi 0, %s37
      %s41 = sphi 0, %s40
      %s57 = sphi 0, %s41
      %s63 = sphi 0, %s65
      %s66 = sphi 0, %s63
      %s67 = sphi 0, %s66
      %s83 = sphi 0, %s67
      %s91 = sphi 0, %s93
      %s94 = sphi 0, %s91
      %s95 = sphi 0, %s94
      %s111 = sphi 0, %s95
      %s119 = sphi 0, %s121
      %s122 = sphi 0, %s119
      %s123 = sphi 0, %s122
      %s139 = sphi 0, %s123
    $region4: #{tpu_custom_call.1} parent=1 // loop_header_branch
      %18 = sbr.rel (%p16) target = $region8
    $region5: #{tpu_custom_call.1} parent=1 // loop_body
      %s20 = ssub.s32 %s15, 1
      %s21 = ssub.s32 %s15, 2
      %s28 = sadd.s32 1, %s23
      %p29 = scmp.ge.s32.totalorder %s28, 1
      %s30 = scalar_select %p29, 0, %s28
      %s31 = sadd.s32 1, %s22
      %s32 = scalar_select %p29, %s31, %s22
      %p33 = scmp.ge.s32.totalorder %s32, 2
      %s34 = scalar_select %p33, 0, %s32
      %s35 = ssub.s32 %s22, %s34
      %p36 = scmp.eq.s32.totalorder %s35, 0
      %s38 = sadd.s32 %s37, 1
      %s39 = scalar_select %p36, %s37, %s38
      %p42 = pneg %p36
      %p43 = scmp.eq.s32.totalorder %s15, 1
      %p44 = por %p42, %p43
      %p45 = scmp.ne.s32.totalorder %s37, %s40
      %p46 = scmp.eq.s32.totalorder %s15, 0
      %p47 = por %p45, %p46
      %p48 = scmp.ne.s32.totalorder %s37, %s40
      %p49 = scmp.eq.s32.totalorder %s20, 1
      %p50 = por %p48, %p49
      %p51 = scmp.ne.s32.totalorder %s40, %s41
      %p52 = scmp.eq.s32.totalorder %s20, 0
      %p53 = por %p51, %p52
      %p54 = scmp.ne.s32.totalorder %s40, %s41
      %p55 = scmp.eq.s32.totalorder %s21, 1
      %p56 = por %p54, %p55
      %p58 = scmp.ne.s32.totalorder %s41, %s57
      %p59 = scmp.eq.s32.totalorder %s21, 0
      %p60 = por %p58, %p59
      %s61 = ssub.s32 %s22, %s34
      %p62 = scmp.eq.s32.totalorder %s61, 0
      %s64 = sadd.s32 %s63, 1
      %s65 = scalar_select %p62, %s63, %s64
      %p68 = pneg %p62
      %p69 = scmp.eq.s32.totalorder %s15, 1
      %p70 = por %p68, %p69
      %p71 = scmp.ne.s32.totalorder %s63, %s66
      %p72 = scmp.eq.s32.totalorder %s15, 0
      %p73 = por %p71, %p72
      %p74 = scmp.ne.s32.totalorder %s63, %s66
      %p75 = scmp.eq.s32.totalorder %s20, 1
      %p76 = por %p74, %p75
      %p77 = scmp.ne.s32.totalorder %s66, %s67
      %p78 = scmp.eq.s32.totalorder %s20, 0
      %p79 = por %p77, %p78
      %p80 = scmp.ne.s32.totalorder %s66, %s67
      %p81 = scmp.eq.s32.totalorder %s21, 1
      %p82 = por %p80, %p81
      %p84 = scmp.ne.s32.totalorder %s67, %s83
      %p85 = scmp.eq.s32.totalorder %s21, 0
      %p86 = por %p84, %p85
      %s87 = ssub.s32 %s22, %s34
      %s88 = ssub.s32 %s23, %s30
      %s89 = sor.u32 %s87, %s88
      %p90 = scmp.eq.s32.totalorder %s89, 0
      %s92 = sadd.s32 %s91, 1
      %s93 = scalar_select %p90, %s91, %s92
      %p96 = pneg %p90
      %p97 = scmp.eq.s32.totalorder %s15, 1
      %p98 = por %p96, %p97
      %p99 = scmp.ne.s32.totalorder %s91, %s94
      %p100 = scmp.eq.s32.totalorder %s15, 0
      %p101 = por %p99, %p100
      %p102 = scmp.ne.s32.totalorder %s91, %s94
      %p103 = scmp.eq.s32.totalorder %s20, 1
      %p104 = por %p102, %p103
      %p105 = scmp.ne.s32.totalorder %s94, %s95
      %p106 = scmp.eq.s32.totalorder %s20, 0
      %p107 = por %p105, %p106
      %p108 = scmp.ne.s32.totalorder %s94, %s95
      %p109 = scmp.eq.s32.totalorder %s21, 1
      %p110 = por %p108, %p109
      %p112 = scmp.ne.s32.totalorder %s95, %s111
      %p113 = scmp.eq.s32.totalorder %s21, 0
      %p114 = por %p112, %p113
      %s115 = ssub.s32 %s22, %s34
      %s116 = ssub.s32 %s23, %s30
      %s117 = sor.u32 %s115, %s116
      %p118 = scmp.eq.s32.totalorder %s117, 0
      %s120 = sadd.s32 %s119, 1
      %s121 = scalar_select %p118, %s119, %s120
      %p124 = pneg %p118
      %p125 = scmp.eq.s32.totalorder %s15, 1
      %p126 = por %p124, %p125
      %p127 = scmp.ne.s32.totalorder %s119, %s122
      %p128 = scmp.eq.s32.totalorder %s15, 0
      %p129 = por %p127, %p128
      %p130 = scmp.ne.s32.totalorder %s119, %s122
      %p131 = scmp.eq.s32.totalorder %s20, 1
      %p132 = por %p130, %p131
      %p133 = scmp.ne.s32.totalorder %s122, %s123
      %p134 = scmp.eq.s32.totalorder %s20, 0
      %p135 = por %p133, %p134
      %p136 = scmp.ne.s32.totalorder %s122, %s123
      %p137 = scmp.eq.s32.totalorder %s21, 1
      %p138 = por %p136, %p137
      %p140 = scmp.ne.s32.totalorder %s123, %s139
      %p141 = scmp.eq.s32.totalorder %s21, 0
      %p142 = por %p140, %p141
      %p143 = scmp.le.s32.totalorder 1, %s15
      %p144 = scmp.lt.s32.totalorder %s15, 3
      %p145 = pnand %p143, %p144
      %p146 = pneg %p145
      // Predicated region
      $region9: #{tpu_custom_call.1} parent=5 // pred_check
        _
      $region10: #{tpu_custom_call.1} parent=5 // pred_check_branch
        %148 = sbr.rel (%p145) target = $region12
      $region11: #{tpu_custom_call.1} parent=5 // pred_region
        %s149 = ssub.s32 %s15, 1
      $region12: #{tpu_custom_call.1} parent=5 // pred_fallthru
        _
      %p150 = scmp.lt.s32.totalorder %s15, 2
      // Predicated region
      $region13: #{tpu_custom_call.1} parent=5 // pred_check
        %p151 = pneg %p150
      $region14: #{tpu_custom_call.1} parent=5 // pred_check_branch
        %153 = sbr.rel (%p151) target = $region16
      $region15: #{tpu_custom_call.1} parent=5 // pred_region
        // Predicated region
        $region17: #{tpu_custom_call.1} parent=15 // pred_check
          %p154 = pneg %p47
        $region18: #{tpu_custom_call.1} parent=15 // pred_check_branch
          %156 = sbr.rel (%p154) target = $region20
        $region19: #{tpu_custom_call.1} parent=15 // pred_region
          %p157 = scmp.lt.s32.totalorder %s22, 1
          %s158 = scalar_select %p157, %s22, 1
          %s159 = smul.addr %s158, 8
          %s160 = scalar_lea.vmem %s0, %s159
        $region20: #{tpu_custom_call.1} parent=15 // pred_fallthru
          _
        // Predicated region
        $region21: #{tpu_custom_call.1} parent=15 // pred_check
          %p161 = pneg %p73
        $region22: #{tpu_custom_call.1} parent=15 // pred_check_branch
          %163 = sbr.rel (%p161) target = $region24
        $region23: #{tpu_custom_call.1} parent=15 // pred_region
          %p164 = scmp.lt.s32.totalorder %s22, 1
          %s165 = scalar_select %p164, %s22, 1
          %s166 = scalar_lea.vmem %s1, %s165
        $region24: #{tpu_custom_call.1} parent=15 // pred_fallthru
          _
        // Predicated region
        $region25: #{tpu_custom_call.1} parent=15 // pred_check
          %p167 = pneg %p101
        $region26: #{tpu_custom_call.1} parent=15 // pred_check_branch
          %169 = sbr.rel (%p167) target = $region28
        $region27: #{tpu_custom_call.1} parent=15 // pred_region
          %s170 = sand.u32 %s91, 1
          %s171 = scalar_lea.sflag [#allocation3], %s170
          %s172 = sand.u32 %s91, 1
          %s173 = smul.addr %s172, 16
          %s174 = scalar_lea.vmem [#allocation2], %s173
          %s175 = smul.u32 2, %s23
          %s177 = ssub.s32 256, 256
          %178 = vsyncadd %s171, %s177
          %s179 = smul.addr %s22, 2
          %s180 = sadd.s32 %s175, %s179
          %s181 = smul.addr %s180, 128
          %s182 = scalar_lea.hbm %s2, %s181
          %s184 = sshll.u32 %s174, 4
          %s185 = int_to_ptr.vmem [resolvable:$true] %s184
          %187 = dma.hbm_to_vmem [thread:$0]  %s182, 256, %s185, %s171
        $region28: #{tpu_custom_call.1} parent=15 // pred_fallthru
          _
      $region16: #{tpu_custom_call.1} parent=5 // pred_fallthru
        _
      %p188 = scmp.le.s32.totalorder 1, %s15
      %p189 = scmp.lt.s32.totalorder %s15, 3
      %p190 = pnand %p188, %p189
      %p191 = pneg %p190
      // Predicated region
      $region29: #{tpu_custom_call.1} parent=5 // pred_check
        _
      $region30: #{tpu_custom_call.1} parent=5 // pred_check_branch
        %193 = sbr.rel (%p190) target = $region32
      $region31: #{tpu_custom_call.1} parent=5 // pred_region
        %s194 = ssub.s32 %s15, 1
        %s195 = sand.u32 %s94, 1
        %s196 = scalar_lea.sflag [#allocation3], %s195
        %s197 = sand.u32 %s94, 1
        %s198 = smul.addr %s197, 16
        %s199 = scalar_lea.vmem [#allocation2], %s198
        // Predicated region
        $region33: #{tpu_custom_call.1} parent=31 // pred_check
          %p200 = pneg %p107
        $region34: #{tpu_custom_call.1} parent=31 // pred_check_branch
          %202 = sbr.rel (%p200) target = $region36
        $region35: #{tpu_custom_call.1} parent=31 // pred_region
          %203 = dma.done %s196, 256
        $region36: #{tpu_custom_call.1} parent=31 // pred_fallthru
          _
        %p204 = scmp.lt.s32.totalorder %s24, 1
        %s205 = scalar_select %p204, %s24, 1
        %s206 = smul.addr %s205, 8
        %s207 = scalar_lea.vmem %s0, %s206
        %p208 = pneg %p53
        %p209 = pneg %p50
        %p210 = scmp.lt.s32.totalorder %s24, 1
        %s211 = scalar_select %p210, %s24, 1
        %s212 = scalar_lea.vmem %s1, %s211
        %p213 = pneg %p79
        %p214 = pneg %p76
        %s215 = sand.u32 %s94, 1
        %s216 = scalar_lea.sflag [#allocation3], %s215
        %s217 = sand.u32 %s94, 1
        %s218 = smul.addr %s217, 16
        %s219 = scalar_lea.vmem [#allocation2], %s218
        %p220 = pneg %p107
        %p221 = pneg %p104
        %p222 = pneg %p135
        %p223 = pneg %p132
        %s224 = sand.u32 %s122, 1
        %s225 = scalar_lea.sflag [#allocation4], %s224
        %s226 = sand.u32 %s122, 1
        %s227 = smul.addr %s226, 32
        %s228 = scalar_lea.vmem [#allocation5], %s227
        %p229 = scmp.lt.s32.totalorder %s24, 1
        %s230 = scalar_select %p229, %s24, 1
        %s231 = smul.addr %s230, 8
        %s232 = scalar_lea.vmem %s0, %s231
        %p233 = scmp.lt.s32.totalorder %s24, 1
        %s234 = scalar_select %p233, %s24, 1
        %s235 = scalar_lea.vmem %s1, %s234
        %s236 = smul.u32 2, %s25
        %s237 = smul.u32 2, %s25
        %v238 = vld [vmem:[%s199] sm:$0xff]
        %v239 = vld [vmem:[%s199 + $0x8] sm:$0xff]
        %v240 = vld [vmem:[%s232] sm:$0xff]
        %v241 = vld [vmem:[%s235] sm:$0x1]
        %vm242 = vcmask 64512
        %v244 = vsel %vm242, %v241, 0
        %v246 = vand.u32 %v239, 4294901760
        %247 = vmatprep.subr.mxu0 %v246
        %v248 = vand.u32 %v238, 4294901760
        %249 = vmatpush1.msra.mxu0 %v248
        %250 = vmatprep.subr.mxu0 0.0
        %251 = vmatpush1.msra.mxu0 0.0
        %252 = vmatprep.subr.mxu0 0.0
        %253 = vmatpush1.msra.mxu0 0.0
        %254 = vmatprep.subr.mxu0 0.0
        %255 = vmatpush1.msra.mxu0 0.0
        %256 = vmatprep.subr.mxu0 0.0
        %257 = vmatpush1.msra.mxu0 0.0
        %258 = vmatprep.subr.mxu0 0.0
        %259 = vmatpush1.msra.mxu0 0.0
        %260 = vmatprep.subr.mxu0 0.0
        %261 = vmatpush1.msra.mxu0 0.0
        %262 = vmatprep.subr.mxu0 0.0
        %263 = vmatpush1.msra.mxu0 0.0
        %264 = vmatprep.subr.mxu0 0.0
        %265 = vmatpush1.msra.mxu0 0.0
        %266 = vmatprep.subr.mxu0 0.0
        %267 = vmatpush1.msra.mxu0 0.0
        %268 = vmatprep.subr.mxu0 0.0
        %269 = vmatpush1.msra.mxu0 0.0
        %270 = vmatprep.subr.mxu0 0.0
        %271 = vmatpush1.msra.mxu0 0.0
        %272 = vmatprep.subr.mxu0 0.0
        %273 = vmatpush1.msra.mxu0 0.0
        %274 = vmatprep.subr.mxu0 0.0
        %275 = vmatpush1.msra.mxu0 0.0
        %276 = vmatprep.subr.mxu0 0.0
        %277 = vmatpush1.msra.mxu0 0.0
        %278 = vmatprep.subr.mxu0 0.0
        %279 = vmatpush1.msra.mxu0 0.0
        %280 = vmatprep.subr.mxu0 0.0
        %281 = vmatpush1.msra.mxu0 0.0
        %282 = vmatprep.subr.mxu0 0.0
        %283 = vmatpush1.msra.mxu0 0.0
        %284 = vmatprep.subr.mxu0 0.0
        %285 = vmatpush1.msra.mxu0 0.0
        %286 = vmatprep.subr.mxu0 0.0
        %287 = vmatpush1.msra.mxu0 0.0
        %288 = vmatprep.subr.mxu0 0.0
        %289 = vmatpush1.msra.mxu0 0.0
        %290 = vmatprep.subr.mxu0 0.0
        %291 = vmatpush1.msra.mxu0 0.0
        %292 = vmatprep.subr.mxu0 0.0
        %293 = vmatpush1.msra.mxu0 0.0
        %294 = vmatprep.subr.mxu0 0.0
        %295 = vmatpush1.msra.mxu0 0.0
        %296 = vmatprep.subr.mxu0 0.0
        %297 = vmatpush1.msra.mxu0 0.0
        %298 = vmatprep.subr.mxu0 0.0
        %299 = vmatpush1.msra.mxu0 0.0
        %300 = vmatprep.subr.mxu0 0.0
        %301 = vmatpush1.msra.mxu0 0.0
        %302 = vmatprep.subr.mxu0 0.0
        %303 = vmatpush1.msra.mxu0 0.0
        %304 = vmatprep.subr.mxu0 0.0
        %305 = vmatpush1.msra.mxu0 0.0
        %306 = vmatprep.subr.mxu0 0.0
        %307 = vmatpush1.msra.mxu0 0.0
        %308 = vmatprep.subr.mxu0 0.0
        %309 = vmatpush1.msra.mxu0 0.0
        %310 = vmatprep.subr.mxu0 0.0
        %311 = vmatpush1.msra.mxu0 0.0
        %312 = vmatprep.mubr.f32.mxu0 0.0
        %v313 = vand.u32 %v244, 4294901760
        %v314 = vsub.f32 %v244, %v313
        %v315 = vand.u32 %v314, 4294901760
        %v316 = vsub.f32 %v314, %v315
        %v317 = vand.u32 %v316, 4294901760
        %318 = vmatmul.mubr.f32.gmra.mrb[0].mxu0 %v317
        %v319 = vpop.f32.mrb[0].mxu0
        %v320 = vadd.f32 0.0, %v319
        %v321 = vpop.f32.mrb[0].mxu0
        %v322 = vadd.f32 0.0, %v321
        %323 = vdwg.mxu0
        %v324 = vand.u32 %v239, 4294901760
        %v325 = vsub.f32 %v239, %v324
        %v326 = vand.u32 %v325, 4294901760
        %v327 = vsub.f32 %v325, %v326
        %v328 = vand.u32 %v327, 4294901760
        %329 = vmatprep.subr.mxu0 %v328
        %v330 = vand.u32 %v238, 4294901760
        %v331 = vsub.f32 %v238, %v330
        %v332 = vand.u32 %v331, 4294901760
        %v333 = vsub.f32 %v331, %v332
        %v334 = vand.u32 %v333, 4294901760
        %335 = vmatpush1.msra.mxu0 %v334
        %336 = vmatprep.subr.mxu0 0.0
        %337 = vmatpush1.msra.mxu0 0.0
        %338 = vmatprep.subr.mxu0 0.0
        %339 = vmatpush1.msra.mxu0 0.0
        %340 = vmatprep.subr.mxu0 0.0
        %341 = vmatpush1.msra.mxu0 0.0
        %342 = vmatprep.subr.mxu0 0.0
        %343 = vmatpush1.msra.mxu0 0.0
        %344 = vmatprep.subr.mxu0 0.0
        %345 = vmatpush1.msra.mxu0 0.0
        %346 = vmatprep.subr.mxu0 0.0
        %347 = vmatpush1.msra.mxu0 0.0
        %348 = vmatprep.subr.mxu0 0.0
        %349 = vmatpush1.msra.mxu0 0.0
        %350 = vmatprep.subr.mxu0 0.0
        %351 = vmatpush1.msra.mxu0 0.0
        %352 = vmatprep.subr.mxu0 0.0
        %353 = vmatpush1.msra.mxu0 0.0
        %354 = vmatprep.subr.mxu0 0.0
        %355 = vmatpush1.msra.mxu0 0.0
        %356 = vmatprep.subr.mxu0 0.0
        %357 = vmatpush1.msra.mxu0 0.0
        %358 = vmatprep.subr.mxu0 0.0
        %359 = vmatpush1.msra.mxu0 0.0
        %360 = vmatprep.subr.mxu0 0.0
        %361 = vmatpush1.msra.mxu0 0.0
        %362 = vmatprep.subr.mxu0 0.0
        %363 = vmatpush1.msra.mxu0 0.0
        %364 = vmatprep.subr.mxu0 0.0
        %365 = vmatpush1.msra.mxu0 0.0
        %366 = vmatprep.subr.mxu0 0.0
        %367 = vmatpush1.msra.mxu0 0.0
        %368 = vmatprep.subr.mxu0 0.0
        %369 = vmatpush1.msra.mxu0 0.0
        %370 = vmatprep.subr.mxu0 0.0
        %371 = vmatpush1.msra.mxu0 0.0
        %372 = vmatprep.subr.mxu0 0.0
        %373 = vmatpush1.msra.mxu0 0.0
        %374 = vmatprep.subr.mxu0 0.0
        %375 = vmatpush1.msra.mxu0 0.0
        %376 = vmatprep.subr.mxu0 0.0
        %377 = vmatpush1.msra.mxu0 0.0
        %378 = vmatprep.subr.mxu0 0.0
        %379 = vmatpush1.msra.mxu0 0.0
        %380 = vmatprep.subr.mxu0 0.0
        %381 = vmatpush1.msra.mxu0 0.0
        %382 = vmatprep.subr.mxu0 0.0
        %383 = vmatpush1.msra.mxu0 0.0
        %384 = vmatprep.subr.mxu0 0.0
        %385 = vmatpush1.msra.mxu0 0.0
        %386 = vmatprep.subr.mxu0 0.0
        %387 = vmatpush1.msra.mxu0 0.0
        %388 = vmatprep.subr.mxu0 0.0
        %389 = vmatpush1.msra.mxu0 0.0
        %390 = vmatprep.subr.mxu0 0.0
        %391 = vmatpush1.msra.mxu0 0.0
        %392 = vmatprep.subr.mxu0 0.0
        %393 = vmatpush1.msra.mxu0 0.0
        %394 = vmatprep.subr.mxu0 0.0
        %395 = vmatpush1.msra.mxu0 0.0
        %396 = vmatprep.subr.mxu0 0.0
        %397 = vmatpush1.msra.mxu0 0.0
        %398 = vmatprep.mubr.f32.mxu0 0.0
        %v399 = vand.u32 %v244, 4294901760
        %400 = vmatmul.mubr.f32.gmra.mrb[0].mxu0 %v399
        %v401 = vpop.f32.mrb[0].mxu0
        %v402 = vadd.f32 %v320, %v401
        %v403 = vpop.f32.mrb[0].mxu0
        %v404 = vadd.f32 %v322, %v403
        %405 = vdwg.mxu0
        %v406 = vand.u32 %v239, 4294901760
        %v407 = vsub.f32 %v239, %v406
        %408 = vmatprep.subr.mxu0 %v407
        %v409 = vand.u32 %v238, 4294901760
        %v410 = vsub.f32 %v238, %v409
        %411 = vmatpush1.msra.mxu0 %v410
        %412 = vmatprep.subr.mxu0 0.0
        %413 = vmatpush1.msra.mxu0 0.0
        %414 = vmatprep.subr.mxu0 0.0
        %415 = vmatpush1.msra.mxu0 0.0
        %416 = vmatprep.subr.mxu0 0.0
        %417 = vmatpush1.msra.mxu0 0.0
        %418 = vmatprep.subr.mxu0 0.0
        %419 = vmatpush1.msra.mxu0 0.0
        %420 = vmatprep.subr.mxu0 0.0
        %421 = vmatpush1.msra.mxu0 0.0
        %422 = vmatprep.subr.mxu0 0.0
        %423 = vmatpush1.msra.mxu0 0.0
        %424 = vmatprep.subr.mxu0 0.0
        %425 = vmatpush1.msra.mxu0 0.0
        %426 = vmatprep.subr.mxu0 0.0
        %427 = vmatpush1.msra.mxu0 0.0
        %428 = vmatprep.subr.mxu0 0.0
        %429 = vmatpush1.msra.mxu0 0.0
        %430 = vmatprep.subr.mxu0 0.0
        %431 = vmatpush1.msra.mxu0 0.0
        %432 = vmatprep.subr.mxu0 0.0
        %433 = vmatpush1.msra.mxu0 0.0
        %434 = vmatprep.subr.mxu0 0.0
        %435 = vmatpush1.msra.mxu0 0.0
        %436 = vmatprep.subr.mxu0 0.0
        %437 = vmatpush1.msra.mxu0 0.0
        %438 = vmatprep.subr.mxu0 0.0
        %439 = vmatpush1.msra.mxu0 0.0
        %440 = vmatprep.subr.mxu0 0.0
        %441 = vmatpush1.msra.mxu0 0.0
        %442 = vmatprep.subr.mxu0 0.0
        %443 = vmatpush1.msra.mxu0 0.0
        %444 = vmatprep.subr.mxu0 0.0
        %445 = vmatpush1.msra.mxu0 0.0
        %446 = vmatprep.subr.mxu0 0.0
        %447 = vmatpush1.msra.mxu0 0.0
        %448 = vmatprep.subr.mxu0 0.0
        %449 = vmatpush1.msra.mxu0 0.0
        %450 = vmatprep.subr.mxu0 0.0
        %451 = vmatpush1.msra.mxu0 0.0
        %452 = vmatprep.subr.mxu0 0.0
        %453 = vmatpush1.msra.mxu0 0.0
        %454 = vmatprep.subr.mxu0 0.0
        %455 = vmatpush1.msra.mxu0 0.0
        %456 = vmatprep.subr.mxu0 0.0
        %457 = vmatpush1.msra.mxu0 0.0
        %458 = vmatprep.subr.mxu0 0.0
        %459 = vmatpush1.msra.mxu0 0.0
        %460 = vmatprep.subr.mxu0 0.0
        %461 = vmatpush1.msra.mxu0 0.0
        %462 = vmatprep.subr.mxu0 0.0
        %463 = vmatpush1.msra.mxu0 0.0
        %464 = vmatprep.subr.mxu0 0.0
        %465 = vmatpush1.msra.mxu0 0.0
        %466 = vmatprep.subr.mxu0 0.0
        %467 = vmatpush1.msra.mxu0 0.0
        %468 = vmatprep.subr.mxu0 0.0
        %469 = vmatpush1.msra.mxu0 0.0
        %470 = vmatprep.subr.mxu0 0.0
        %471 = vmatpush1.msra.mxu0 0.0
        %472 = vmatprep.subr.mxu0 0.0
        %473 = vmatpush1.msra.mxu0 0.0
        %474 = vmatprep.mubr.f32.mxu0 0.0
        %v475 = vand.u32 %v244, 4294901760
        %v476 = vsub.f32 %v244, %v475
        %477 = vmatmul.mubr.f32.gmra.mrb[0].mxu0 %v476
        %v478 = vpop.f32.mrb[0].mxu0
        %v479 = vadd.f32 %v402, %v478
        %v480 = vpop.f32.mrb[0].mxu0
        %v481 = vadd.f32 %v404, %v480
        %482 = vdwg.mxu0
        %v483 = vand.u32 %v239, 4294901760
        %484 = vmatprep.subr.mxu0 %v483
        %v485 = vand.u32 %v238, 4294901760
        %486 = vmatpush1.msra.mxu0 %v485
        %487 = vmatprep.subr.mxu0 0.0
        %488 = vmatpush1.msra.mxu0 0.0
        %489 = vmatprep.subr.mxu0 0.0
        %490 = vmatpush1.msra.mxu0 0.0
        %491 = vmatprep.subr.mxu0 0.0
        %492 = vmatpush1.msra.mxu0 0.0
        %493 = vmatprep.subr.mxu0 0.0
        %494 = vmatpush1.msra.mxu0 0.0
        %495 = vmatprep.subr.mxu0 0.0
        %496 = vmatpush1.msra.mxu0 0.0
        %497 = vmatprep.subr.mxu0 0.0
        %498 = vmatpush1.msra.mxu0 0.0
        %499 = vmatprep.subr.mxu0 0.0
        %500 = vmatpush1.msra.mxu0 0.0
        %501 = vmatprep.subr.mxu0 0.0
        %502 = vmatpush1.msra.mxu0 0.0
        %503 = vmatprep.subr.mxu0 0.0
        %504 = vmatpush1.msra.mxu0 0.0
        %505 = vmatprep.subr.mxu0 0.0
        %506 = vmatpush1.msra.mxu0 0.0
        %507 = vmatprep.subr.mxu0 0.0
        %508 = vmatpush1.msra.mxu0 0.0
        %509 = vmatprep.subr.mxu0 0.0
        %510 = vmatpush1.msra.mxu0 0.0
        %511 = vmatprep.subr.mxu0 0.0
        %512 = vmatpush1.msra.mxu0 0.0
        %513 = vmatprep.subr.mxu0 0.0
        %514 = vmatpush1.msra.mxu0 0.0
        %515 = vmatprep.subr.mxu0 0.0
        %516 = vmatpush1.msra.mxu0 0.0
        %517 = vmatprep.subr.mxu0 0.0
        %518 = vmatpush1.msra.mxu0 0.0
        %519 = vmatprep.subr.mxu0 0.0
        %520 = vmatpush1.msra.mxu0 0.0
        %521 = vmatprep.subr.mxu0 0.0
        %522 = vmatpush1.msra.mxu0 0.0
        %523 = vmatprep.subr.mxu0 0.0
        %524 = vmatpush1.msra.mxu0 0.0
        %525 = vmatprep.subr.mxu0 0.0
        %526 = vmatpush1.msra.mxu0 0.0
        %527 = vmatprep.subr.mxu0 0.0
        %528 = vmatpush1.msra.mxu0 0.0
        %529 = vmatprep.subr.mxu0 0.0
        %530 = vmatpush1.msra.mxu0 0.0
        %531 = vmatprep.subr.mxu0 0.0
        %532 = vmatpush1.msra.mxu0 0.0
        %533 = vmatprep.subr.mxu0 0.0
        %534 = vmatpush1.msra.mxu0 0.0
        %535 = vmatprep.subr.mxu0 0.0
        %536 = vmatpush1.msra.mxu0 0.0
        %537 = vmatprep.subr.mxu0 0.0
        %538 = vmatpush1.msra.mxu0 0.0
        %539 = vmatprep.subr.mxu0 0.0
        %540 = vmatpush1.msra.mxu0 0.0
        %541 = vmatprep.subr.mxu0 0.0
        %542 = vmatpush1.msra.mxu0 0.0
        %543 = vmatprep.subr.mxu0 0.0
        %544 = vmatpush1.msra.mxu0 0.0
        %545 = vmatprep.subr.mxu0 0.0
        %546 = vmatpush1.msra.mxu0 0.0
        %547 = vmatprep.subr.mxu0 0.0
        %548 = vmatpush1.msra.mxu0 0.0
        %549 = vmatprep.mubr.f32.mxu0 0.0
        %v550 = vand.u32 %v244, 4294901760
        %v551 = vsub.f32 %v244, %v550
        %v552 = vand.u32 %v551, 4294901760
        %553 = vmatmul.mubr.f32.gmra.mrb[0].mxu0 %v552
        %v554 = vpop.f32.mrb[0].mxu0
        %v555 = vadd.f32 %v479, %v554
        %v556 = vpop.f32.mrb[0].mxu0
        %v557 = vadd.f32 %v481, %v556
        %558 = vdwg.mxu0
        %v559 = vand.u32 %v239, 4294901760
        %v560 = vsub.f32 %v239, %v559
        %v561 = vand.u32 %v560, 4294901760
        %562 = vmatprep.subr.mxu0 %v561
        %v563 = vand.u32 %v238, 4294901760
        %v564 = vsub.f32 %v238, %v563
        %v565 = vand.u32 %v564, 4294901760
        %566 = vmatpush1.msra.mxu0 %v565
        %567 = vmatprep.subr.mxu0 0.0
        %568 = vmatpush1.msra.mxu0 0.0
        %569 = vmatprep.subr.mxu0 0.0
        %570 = vmatpush1.msra.mxu0 0.0
        %571 = vmatprep.subr.mxu0 0.0
        %572 = vmatpush1.msra.mxu0 0.0
        %573 = vmatprep.subr.mxu0 0.0
        %574 = vmatpush1.msra.mxu0 0.0
        %575 = vmatprep.subr.mxu0 0.0
        %576 = vmatpush1.msra.mxu0 0.0
        %577 = vmatprep.subr.mxu0 0.0
        %578 = vmatpush1.msra.mxu0 0.0
        %579 = vmatprep.subr.mxu0 0.0
        %580 = vmatpush1.msra.mxu0 0.0
        %581 = vmatprep.subr.mxu0 0.0
        %582 = vmatpush1.msra.mxu0 0.0
        %583 = vmatprep.subr.mxu0 0.0
        %584 = vmatpush1.msra.mxu0 0.0
        %585 = vmatprep.subr.mxu0 0.0
        %586 = vmatpush1.msra.mxu0 0.0
        %587 = vmatprep.subr.mxu0 0.0
        %588 = vmatpush1.msra.mxu0 0.0
        %589 = vmatprep.subr.mxu0 0.0
        %590 = vmatpush1.msra.mxu0 0.0
        %591 = vmatprep.subr.mxu0 0.0
        %592 = vmatpush1.msra.mxu0 0.0
        %593 = vmatprep.subr.mxu0 0.0
        %594 = vmatpush1.msra.mxu0 0.0
        %595 = vmatprep.subr.mxu0 0.0
        %596 = vmatpush1.msra.mxu0 0.0
        %597 = vmatprep.subr.mxu0 0.0
        %598 = vmatpush1.msra.mxu0 0.0
        %599 = vmatprep.subr.mxu0 0.0
        %600 = vmatpush1.msra.mxu0 0.0
        %601 = vmatprep.subr.mxu0 0.0
        %602 = vmatpush1.msra.mxu0 0.0
        %603 = vmatprep.subr.mxu0 0.0
        %604 = vmatpush1.msra.mxu0 0.0
        %605 = vmatprep.subr.mxu0 0.0
        %606 = vmatpush1.msra.mxu0 0.0
        %607 = vmatprep.subr.mxu0 0.0
        %608 = vmatpush1.msra.mxu0 0.0
        %609 = vmatprep.subr.mxu0 0.0
        %610 = vmatpush1.msra.mxu0 0.0
        %611 = vmatprep.subr.mxu0 0.0
        %612 = vmatpush1.msra.mxu0 0.0
        %613 = vmatprep.subr.mxu0 0.0
        %614 = vmatpush1.msra.mxu0 0.0
        %615 = vmatprep.subr.mxu0 0.0
        %616 = vmatpush1.msra.mxu0 0.0
        %617 = vmatprep.subr.mxu0 0.0
        %618 = vmatpush1.msra.mxu0 0.0
        %619 = vmatprep.subr.mxu0 0.0
        %620 = vmatpush1.msra.mxu0 0.0
        %621 = vmatprep.subr.mxu0 0.0
        %622 = vmatpush1.msra.mxu0 0.0
        %623 = vmatprep.subr.mxu0 0.0
        %624 = vmatpush1.msra.mxu0 0.0
        %625 = vmatprep.subr.mxu0 0.0
        %626 = vmatpush1.msra.mxu0 0.0
        %627 = vmatprep.subr.mxu0 0.0
        %628 = vmatpush1.msra.mxu0 0.0
        %629 = vmatprep.mubr.f32.mxu0 0.0
        %v630 = vand.u32 %v244, 4294901760
        %631 = vmatmul.mubr.f32.gmra.mrb[0].mxu0 %v630
        %v632 = vpop.f32.mrb[0].mxu0
        %v633 = vadd.f32 %v555, %v632
        %v634 = vpop.f32.mrb[0].mxu0
        %v635 = vadd.f32 %v557, %v634
        %636 = vdwg.mxu0
        %v637 = vand.u32 %v239, 4294901760
        %638 = vmatprep.subr.mxu0 %v637
        %v639 = vand.u32 %v238, 4294901760
        %640 = vmatpush1.msra.mxu0 %v639
        %641 = vmatprep.subr.mxu0 0.0
        %642 = vmatpush1.msra.mxu0 0.0
        %643 = vmatprep.subr.mxu0 0.0
        %644 = vmatpush1.msra.mxu0 0.0
        %645 = vmatprep.subr.mxu0 0.0
        %646 = vmatpush1.msra.mxu0 0.0
        %647 = vmatprep.subr.mxu0 0.0
        %648 = vmatpush1.msra.mxu0 0.0
        %649 = vmatprep.subr.mxu0 0.0
        %650 = vmatpush1.msra.mxu0 0.0
        %651 = vmatprep.subr.mxu0 0.0
        %652 = vmatpush1.msra.mxu0 0.0
        %653 = vmatprep.subr.mxu0 0.0
        %654 = vmatpush1.msra.mxu0 0.0
        %655 = vmatprep.subr.mxu0 0.0
        %656 = vmatpush1.msra.mxu0 0.0
        %657 = vmatprep.subr.mxu0 0.0
        %658 = vmatpush1.msra.mxu0 0.0
        %659 = vmatprep.subr.mxu0 0.0
        %660 = vmatpush1.msra.mxu0 0.0
        %661 = vmatprep.subr.mxu0 0.0
        %662 = vmatpush1.msra.mxu0 0.0
        %663 = vmatprep.subr.mxu0 0.0
        %664 = vmatpush1.msra.mxu0 0.0
        %665 = vmatprep.subr.mxu0 0.0
        %666 = vmatpush1.msra.mxu0 0.0
        %667 = vmatprep.subr.mxu0 0.0
        %668 = vmatpush1.msra.mxu0 0.0
        %669 = vmatprep.subr.mxu0 0.0
        %670 = vmatpush1.msra.mxu0 0.0
        %671 = vmatprep.subr.mxu0 0.0
        %672 = vmatpush1.msra.mxu0 0.0
        %673 = vmatprep.subr.mxu0 0.0
        %674 = vmatpush1.msra.mxu0 0.0
        %675 = vmatprep.subr.mxu0 0.0
        %676 = vmatpush1.msra.mxu0 0.0
        %677 = vmatprep.subr.mxu0 0.0
        %678 = vmatpush1.msra.mxu0 0.0
        %679 = vmatprep.subr.mxu0 0.0
        %680 = vmatpush1.msra.mxu0 0.0
        %681 = vmatprep.subr.mxu0 0.0
        %682 = vmatpush1.msra.mxu0 0.0
        %683 = vmatprep.subr.mxu0 0.0
        %684 = vmatpush1.msra.mxu0 0.0
        %685 = vmatprep.subr.mxu0 0.0
        %686 = vmatpush1.msra.mxu0 0.0
        %687 = vmatprep.subr.mxu0 0.0
        %688 = vmatpush1.msra.mxu0 0.0
        %689 = vmatprep.subr.mxu0 0.0
        %690 = vmatpush1.msra.mxu0 0.0
        %691 = vmatprep.subr.mxu0 0.0
        %692 = vmatpush1.msra.mxu0 0.0
        %693 = vmatprep.subr.mxu0 0.0
        %694 = vmatpush1.msra.mxu0 0.0
        %695 = vmatprep.subr.mxu0 0.0
        %696 = vmatpush1.msra.mxu0 0.0
        %697 = vmatprep.subr.mxu0 0.0
        %698 = vmatpush1.msra.mxu0 0.0
        %699 = vmatprep.subr.mxu0 0.0
        %700 = vmatpush1.msra.mxu0 0.0
        %701 = vmatprep.subr.mxu0 0.0
        %702 = vmatpush1.msra.mxu0 0.0
        %703 = vmatprep.mubr.f32.mxu0 0.0
        %v704 = vand.u32 %v244, 4294901760
        %705 = vmatmul.mubr.f32.gmra.mrb[0].mxu0 %v704
        %v706 = vpop.f32.mrb[0].mxu0
        %v707 = vadd.f32 %v633, %v706
        %v708 = vpop.f32.mrb[0].mxu0
        %v709 = vadd.f32 %v635, %v708
        %710 = vdwg.mxu0
        %v711 = vlaneseq
        %v712 = vshrl.u32 %v711, 7
        %v713 = vsub.s32 0, %v712
        %v714 = vrot.slane %v707, %v713
        %v715 = vlaneseq
        %v716 = vshrl.u32 %v715, 7
        %v717 = vsub.s32 0, %v716
        %v718 = vrot.slane %v709, %v717
        %720 = vset.pattern.permute.xlu0 0
        %721 = vperm.xlu0 %720, %v240
        %v722 = vpop.permute.xlu0 %721
        %v724 = vmul.f32 %v714, %v722
        %v725 = vmul.f32 %v718, %v722
        %v726 = vsub.f32 %v238, %v724
        %v727 = vsub.f32 %v239, %v725
        %728 = vst [vmem:[%s228] sm:$0xff] %v726
        %729 = vst [vmem:[%s228 + $0x8] sm:$0xff] %v727
        %730 = vst [vmem:[%s228 + $0x10] sm:$0xff] %v722
        %731 = vst [vmem:[%s228 + $0x18] sm:$0xff] %v722
        %s732 = sand.u32 %s122, 1
        %s733 = scalar_lea.sflag [#allocation4], %s732
        %s734 = sand.u32 %s122, 1
        %s735 = smul.addr %s734, 32
        %s736 = scalar_lea.vmem [#allocation5], %s735
        // Predicated region
        $region37: #{tpu_custom_call.1} parent=31 // pred_check
          %p737 = pneg %p132
        $region38: #{tpu_custom_call.1} parent=31 // pred_check_branch
          %739 = sbr.rel (%p737) target = $region40
        $region39: #{tpu_custom_call.1} parent=31 // pred_region
          %s740 = smul.u32 2, %s25
          %s742 = ssub.s32 512, 512
          %743 = vsyncadd %s733, %s742
          %s744 = smul.addr %s24, 4
          %s745 = sadd.s32 %s740, %s744
          %s746 = smul.addr %s745, 128
          %s747 = scalar_lea.hbm %s3, %s746
          %s748 = sshll.u32 %s736, 4
          %s749 = int_to_ptr.vmem [resolvable:$true] %s748
          %754 = dma.vmem_to_hbm [thread:$0]  %s749, 512, %s747, %s733, 256, 256, 16
        $region40: #{tpu_custom_call.1} parent=31 // pred_fallthru
          _
      $region32: #{tpu_custom_call.1} parent=5 // pred_fallthru
        _
      %p755 = scmp.le.s32.totalorder 2, %s15
      // Predicated region
      $region41: #{tpu_custom_call.1} parent=5 // pred_check
        %p756 = pneg %p755
      $region42: #{tpu_custom_call.1} parent=5 // pred_check_branch
        %758 = sbr.rel (%p756) target = $region44
      $region43: #{tpu_custom_call.1} parent=5 // pred_region
        %s759 = ssub.s32 %s15, 2
        // Predicated region
        $region45: #{tpu_custom_call.1} parent=43 // pred_check
          %p760 = pneg %p138
        $region46: #{tpu_custom_call.1} parent=43 // pred_check_branch
          %762 = sbr.rel (%p760) target = $region48
        $region47: #{tpu_custom_call.1} parent=43 // pred_region
          %s763 = sand.u32 %s123, 1
          %s764 = scalar_lea.sflag [#allocation4], %s763
          %s765 = sand.u32 %s123, 1
          %s766 = smul.addr %s765, 32
          %s767 = scalar_lea.vmem [#allocation5], %s766
          %768 = dma.done %s764, 512
        $region48: #{tpu_custom_call.1} parent=43 // pred_fallthru
          _
      $region44: #{tpu_custom_call.1} parent=5 // pred_fallthru
        _
    $region6: #{tpu_custom_call.1} parent=1 // loop_footer
      %s19 = sadd.s32 1, %s15
    $region7: #{tpu_custom_call.1} parent=1 // loop_footer_branch
      %14 = sbr.rel target = $region3
    $region8: #{tpu_custom_call.1} parent=1 // loop_exit
      _
    %769 = vsyncpa [#allocation3], 1
    %s770 = scalar_lea.sflag [#allocation3], 1
    %771 = vsyncpa %s770, 1
    %772 = vsyncpa [#allocation4], 1
    %s773 = scalar_lea.sflag [#allocation4], 1
    %774 = vsyncpa %s773, 1

</llo_original>
